<compile_context>
chip_gen: v7x
topology: tpu7x:2x2x1
jax: 0.10.0
libtpu: 0.0.40
codegen_flags: <defaults>
</compile_context>

<pallas_src>
import functools
import math

import jax
import jax.numpy as jnp
from jax import lax
from jax.experimental import pallas as pl
from jax.experimental.pallas import tpu as pltpu


_LANE = 128
_SUBLANE = 8
_MAX_BLOCK_ROWS = 8192                 # 8192 x 128 x 4B = 4 MiB per f32 block
_MAX_RESIDENT_LATENT_BYTES = 2 << 20   # keep mu/logvar resident only if small
_VMEM_LIMIT = 32 * 1024 * 1024         # safe on v5e/v6e (128 MiB) and v7x (64 MiB)


def _cdiv(a, b):
    return -(-a // b)


def _round_up(a, m):
    return _cdiv(a, m) * m


def _num_parallel_cores():
    """2 on multi-TensorCore chips (v7x); 1 on single-TC chips (v5e/v6e)."""
    try:
        kind = jax.local_devices()[0].device_kind.lower()
    except Exception:
        return 1
    return 2 if ("v7" in kind or "7x" in kind) else 1


def _flatten_rows(x):
    """Flatten to a lane-dense (rows, 128) layout in native dtype.

    Reshape of a contiguous array is metadata-only; the zero-pad copy only
    happens when numel is not a multiple of 128 (exact for |x|, x^2 and the
    KL integrand 1 + 0 - 0 - exp(0) = 0).
    """
    n = math.prod(x.shape)
    flat = jnp.reshape(x, (n,))
    pad = (-n) % _LANE
    if pad:
        # TODO(synk): handle the ragged tail in-kernel (1-D block + flat-index
        # mask) to avoid this extra HBM copy; it's a no-op for lane-aligned
        # element counts, which covers typical image tensors.
        flat = jnp.pad(flat, (0, pad))
    return jnp.reshape(flat, (flat.shape[0] // _LANE, _LANE))


def _loss_kernel(*refs, mode, block_rows, nb, n_rows, mask_from, fuse_kl):
    if fuse_kl:
        tgt_ref, inp_ref, mu_ref, lv_ref, recon_ref, kl_ref, acc_ref = refs
    else:
        tgt_ref, inp_ref, recon_ref, acc_ref = refs
        mu_ref = lv_ref = kl_ref = None

    i = pl.program_id(0)        # per-core axis (CORE_PARALLEL on v7x, size 1 else)
    j = pl.program_id(1)        # streaming / reduction axis ("arbitrary")
    idx = i * nb + j            # unclamped global block index

    @pl.when(j == 0)
    def _init():
        acc_ref[...] = jnp.zeros_like(acc_ref)
        if fuse_kl:
            kl_ref[...] = jnp.zeros_like(kl_ref)

    if fuse_kl:
        # KL term: tiny arrays, resident in VMEM, reduced exactly once (core 0).
        @pl.when(jnp.logical_and(i == 0, j == 0))
        def _kl():
            mu = mu_ref[...].astype(jnp.float32)
            lv = lv_ref[...].astype(jnp.float32)
            kl = jnp.sum(1.0 + lv - mu * mu - jnp.exp(lv))
            kl_ref[...] = kl.reshape(1, 1, 1)

    # Reconstruction term: one (block_rows, 128) tile per grid step.
    tgt = tgt_ref[...].astype(jnp.float32)
    inp = inp_ref[...].astype(jnp.float32)
    d = inp - tgt
    val = jnp.abs(d) if mode == "L1" else d * d

    def _accum(v):
        # Elementwise (VPU) accumulation into a vreg-shaped scratch; the single
        # cross-lane reduction happens only once, in the epilogue below.
        if block_rows == _SUBLANE:
            acc_ref[...] += v
        elif block_rows % _SUBLANE == 0:
            acc_ref[...] += jnp.sum(
                v.reshape(block_rows // _SUBLANE, _SUBLANE, _LANE), axis=0)
        else:
            # Single-block path with a ragged sublane count (block == full rows).
            acc_ref[pl.ds(0, 1), :] = (acc_ref[pl.ds(0, 1), :]
                                       + jnp.sum(v, axis=0, keepdims=True))

    if mask_from is None:
        _accum(val)
    else:
        # Only boundary / overflow blocks pay for the row mask.
        @pl.when(idx < mask_from)
        def _interior():
            _accum(val)

        @pl.when(idx >= mask_from)
        def _boundary():
            rows = (lax.broadcasted_iota(jnp.int32, (block_rows, 1), 0)
                    + idx * block_rows)
            # jnp.where is a select: garbage/NaN in invalid rows is discarded,
            # never multiplied. Overflow (clamped-duplicate) blocks use the
            # unclamped idx here, so they mask to exactly zero.
            _accum(jnp.where(rows < n_rows, val, 0.0))

    @pl.when(j == nb - 1)
    def _fin():
        recon_ref[...] = jnp.sum(acc_ref[...]).reshape(1, 1, 1)


def _loss_sums(target, inp, mu, covar, mode):
    """Returns (recon_sum, kl_sum); recon streams through one Pallas kernel."""
    tgt2 = _flatten_rows(target)
    inp2 = _flatten_rows(inp)
    n_rows = tgt2.shape[0]

    P = _num_parallel_cores()
    if P > 1 and n_rows >= P * _SUBLANE:
        block_rows = min(_MAX_BLOCK_ROWS,
                         _round_up(_cdiv(n_rows, P), _SUBLANE))
    else:
        P = 1
        block_rows = n_rows if n_rows <= _MAX_BLOCK_ROWS else _MAX_BLOCK_ROWS

    total_blocks = _cdiv(n_rows, block_rows)
    nb = _cdiv(total_blocks, P)

    has_tail = (n_rows % block_rows) != 0
    has_overflow = (P * nb) > total_blocks
    if has_tail:
        mask_from = total_blocks - 1
    elif has_overflow:
        mask_from = total_blocks
    else:
        mask_from = None

    if has_overflow:
        # Overflow steps clamp to the block index of the previous step on the
        # same core (consecutive same index -> no re-fetch); their rows are
        # fully masked out in-kernel via the unclamped index.
        def recon_map(i, j):
            return (jnp.minimum(i * nb + j, total_blocks - 1), 0)
    else:
        def recon_map(i, j):
            return (i * nb + j, 0)

    latent_bytes = max(mu.size * mu.dtype.itemsize,
                       covar.size * covar.dtype.itemsize)
    fuse_kl = latent_bytes <= _MAX_RESIDENT_LATENT_BYTES

    kernel = functools.partial(
        _loss_kernel, mode=mode, block_rows=block_rows, nb=nb,
        n_rows=n_rows, mask_from=mask_from, fuse_kl=fuse_kl)

    recon_spec = pl.BlockSpec((block_rows, _LANE), recon_map)
    out_spec = pl.BlockSpec((1, 1, 1), lambda i, j: (i, 0, 0))

    if P > 1:
        dim_sem = (pltpu.CORE_PARALLEL, pltpu.ARBITRARY)
    else:
        dim_sem = ("arbitrary", "arbitrary")
    cparams = pltpu.CompilerParams(dimension_semantics=dim_sem,
                                   vmem_limit_bytes=_VMEM_LIMIT)

    if fuse_kl:
        mu2 = _flatten_rows(mu)
        lv2 = _flatten_rows(covar)
        recon_part, kl_part = pl.pallas_call(
            kernel,
            out_shape=(jax.ShapeDtypeStruct((P, 1, 1), jnp.float32),
                       jax.ShapeDtypeStruct((P, 1, 1), jnp.float32)),
            grid_spec=pltpu.PrefetchScalarGridSpec(
                num_scalar_prefetch=0,
                grid=(P, nb),
                in_specs=[
                    recon_spec, recon_spec,
                    pl.BlockSpec(mu2.shape, lambda i, j: (0, 0)),
                    pl.BlockSpec(lv2.shape, lambda i, j: (0, 0)),
                ],
                out_specs=[out_spec, out_spec],
                scratch_shapes=[pltpu.VMEM((_SUBLANE, _LANE), jnp.float32)],
            ),
            compiler_params=cparams,
        )(tgt2, inp2, mu2, lv2)
        kl_sum = jnp.sum(kl_part)
    else:
        # Large latents: don't hold them VMEM-resident; recon-only kernel and a
        # small fused XLA reduction for the KL term (still fully on device).
        recon_part = pl.pallas_call(
            kernel,
            out_shape=jax.ShapeDtypeStruct((P, 1, 1), jnp.float32),
            grid_spec=pltpu.PrefetchScalarGridSpec(
                num_scalar_prefetch=0,
                grid=(P, nb),
                in_specs=[recon_spec, recon_spec],
                out_specs=out_spec,
                scratch_shapes=[pltpu.VMEM((_SUBLANE, _LANE), jnp.float32)],
            ),
            compiler_params=cparams,
        )(tgt2, inp2)
        mu32 = mu.astype(jnp.float32)
        lv32 = covar.astype(jnp.float32)
        kl_sum = jnp.sum(1.0 + lv32 - mu32 * mu32 - jnp.exp(lv32))

    return jnp.sum(recon_part), kl_sum


def _forward(target, inp, mu, covar, *, mode, w_kl, kl_th, use_kl,
             use_kl_threshold):
    recon_sum, kl_sum = _loss_sums(target, inp, mu, covar, mode)

    batch = mu.shape[0]
    n_elems = math.prod(inp.shape)
    L_recon = recon_sum / n_elems
    L_kl = -0.5 * kl_sum / batch

    # Device-side gate (mirrors `L_kl.item() < kl_th` without a host sync).
    if use_kl_threshold:
        w = jnp.where(L_kl < kl_th, 0.0, w_kl)
    else:
        w = w_kl
    L = L_recon + L_kl * w if use_kl else L_recon
    return L, L_recon, L_kl


class PallasLoss:
    """Mirrors the PyTorch `Loss` forward semantics."""

    def __init__(self, dic):
        self.w_kl = float(dic["w_kl"])
        self.kl_th = float(dic["kl_threshold"])
        self.use_kl = bool(dic["use_kl"])
        self.use_kl_threshold = bool(dic["use_kl_threshold"])
        self.recon_loss = dic["recon_loss"]
        if self.recon_loss not in ("L1", "L2"):
            raise NameError("Loss mode does not exist!")
        self._forward = jax.jit(functools.partial(
            _forward, mode=self.recon_loss, w_kl=self.w_kl, kl_th=self.kl_th,
            use_kl=self.use_kl, use_kl_threshold=self.use_kl_threshold))

    def __call__(self, target, inp, mu, covar):
        return self._forward(target, inp, mu, covar)


if __name__ == "__main__":
    key = jax.random.PRNGKey(0)
    k1, k2, k3, k4 = jax.random.split(key, 4)

    # image-like tensors (NCHW) and latent stats (NCHW latent grid)
    target = jax.random.normal(k1, (2, 4, 16, 16), dtype=jnp.float32)
    inp = jax.random.normal(k2, (2, 4, 16, 16), dtype=jnp.float32)
    mu = jax.random.normal(k3, (2, 8, 4, 4), dtype=jnp.float32)
    covar = jax.random.normal(k4, (2, 8, 4, 4), dtype=jnp.float32)  # logvar

    # L1, no threshold
    dic = dict(w_kl=0.01, kl_threshold=0.1, use_kl=True,
               use_kl_threshold=False, recon_loss="L1")
    loss_fn = PallasLoss(dic)
    L, L_recon, L_kl = loss_fn(target, inp, mu, covar)
    jax.block_until_ready((L, L_recon, L_kl))

    ref_kl = -0.5 * jnp.mean(
        jnp.sum(1 + covar - mu ** 2 - jnp.exp(covar), axis=(1, 2, 3)))
    ref_recon = jnp.mean(jnp.abs(inp - target))
    ref_L = ref_recon + ref_kl * dic["w_kl"]
    assert jnp.allclose(L_kl, ref_kl, rtol=1e-5, atol=1e-5)
    assert jnp.allclose(L_recon, ref_recon, rtol=1e-5, atol=1e-5)
    assert jnp.allclose(L, ref_L, rtol=1e-5, atol=1e-5)

    # L2 + threshold path (device-side gate)
    dic2 = dict(w_kl=0.01, kl_threshold=0.1, use_kl=True,
                use_kl_threshold=True, recon_loss="L2")
    loss_fn2 = PallasLoss(dic2)
    L2, L2_recon, L2_kl = loss_fn2(target, inp, mu, covar)
    jax.block_until_ready((L2, L2_recon, L2_kl))
    ref2_recon = jnp.mean(jnp.square(inp - target))
    w2 = 0.0 if float(ref_kl) < dic2["kl_threshold"] else dic2["w_kl"]
    ref2_L = ref2_recon + ref_kl * w2
    assert jnp.allclose(L2_kl, ref_kl, rtol=1e-5, atol=1e-5)
    assert jnp.allclose(L2_recon, ref2_recon, rtol=1e-5, atol=1e-5)
    assert jnp.allclose(L2, ref2_L, rtol=1e-5, atol=1e-5)

    print("KERNEL_OK")
</pallas_src>

<mosaic_0001>
module attributes {stable_mosaic.version = 11 : i64} {
  func.func @_loss_kernel(%arg0: i32, %arg1: i32, %arg2: memref<16x128xf32, #tpu.memory_space<vmem>>, %arg3: memref<16x128xf32, #tpu.memory_space<vmem>>, %arg4: memref<2x128xf32, #tpu.memory_space<vmem>>, %arg5: memref<2x128xf32, #tpu.memory_space<vmem>>, %arg6: memref<1x1x1xf32, #tpu.memory_space<vmem>>, %arg7: memref<1x1x1xf32, #tpu.memory_space<vmem>>, %arg8: memref<8x128xf32, #tpu.memory_space<vmem>>) attributes {dimension_semantics = [#tpu.dimension_semantics<arbitrary>, #tpu.dimension_semantics<arbitrary>], iteration_bounds = array<i64: 1, 1>, scalar_prefetch = 0 : i64, scratch_operands = 1 : i64, tpu.core_type = #tpu.core_type<tc>, window_params = [{transform_indices = @transform_0, window_bounds = array<i64: 16, 128>}, {transform_indices = @transform_1, window_bounds = array<i64: 16, 128>}, {pipeline_mode = #tpu.pipeline_mode<synchronous>, transform_indices = @transform_2, window_bounds = array<i64: 2, 128>}, {pipeline_mode = #tpu.pipeline_mode<synchronous>, transform_indices = @transform_3, window_bounds = array<i64: 2, 128>}, {transform_indices = @transform_4, window_bounds = array<i64: 1, 1, 1>}, {transform_indices = @transform_5, window_bounds = array<i64: 1, 1, 1>}]} {
    %c0_i32 = arith.constant 0 : i32
    %0 = arith.cmpi eq, %arg1, %c0_i32 : i32
    %1 = arith.extui %0 : i1 to i32
    %c0_i32_0 = arith.constant 0 : i32
    %2 = arith.cmpi ne, %1, %c0_i32_0 : i32
    scf.if %2 {
      %cst_13 = arith.constant 0.000000e+00 : f32
      %20 = vector.broadcast %cst_13 : f32 to vector<8x128xf32>
      %c0_14 = arith.constant 0 : index
      %c0_15 = arith.constant 0 : index
      %21 = vector.load %arg8[%c0_14, %c0_15] : memref<8x128xf32, #tpu.memory_space<vmem>>, vector<8x128xf32>
      tpu.vector_store %arg8[%c0_14, %c0_15], %20 {strides = array<i32>} : memref<8x128xf32, #tpu.memory_space<vmem>>, vector<8x128xf32>,
      %cst_16 = arith.constant 0.000000e+00 : f32
      %22 = vector.broadcast %cst_16 : f32 to vector<1x1x1xf32>
      %c0_17 = arith.constant 0 : index
      %c0_18 = arith.constant 0 : index
      %c0_19 = arith.constant 0 : index
      %23 = vector.load %arg7[%c0_17, %c0_18, %c0_19] : memref<1x1x1xf32, #tpu.memory_space<vmem>>, vector<1x1x1xf32>
      tpu.vector_store %arg7[%c0_17, %c0_18, %c0_19], %22 {strides = array<i32>} : memref<1x1x1xf32, #tpu.memory_space<vmem>>, vector<1x1x1xf32>,
    } else {
    }
    %c0_i32_1 = arith.constant 0 : i32
    %3 = arith.cmpi eq, %arg0, %c0_i32_1 : i32
    %c0_i32_2 = arith.constant 0 : i32
    %4 = arith.cmpi eq, %arg1, %c0_i32_2 : i32
    %5 = arith.andi %3, %4 : i1
    %6 = arith.extui %5 : i1 to i32
    %c0_i32_3 = arith.constant 0 : i32
    %7 = arith.cmpi ne, %6, %c0_i32_3 : i32
    scf.if %7 {
      %c0_13 = arith.constant 0 : index
      %c0_14 = arith.constant 0 : index
      %20 = vector.load %arg4[%c0_13, %c0_14] : memref<2x128xf32, #tpu.memory_space<vmem>>, vector<2x128xf32>
      %c0_15 = arith.constant 0 : index
      %c0_16 = arith.constant 0 : index
      %21 = vector.load %arg5[%c0_15, %c0_16] : memref<2x128xf32, #tpu.memory_space<vmem>>, vector<2x128xf32>
      %cst_17 = arith.constant 1.000000e+00 : f32
      %22 = vector.broadcast %cst_17 : f32 to vector<2x128xf32>
      %23 = arith.addf %22, %21 : vector<2x128xf32>
      %24 = arith.mulf %20, %20 : vector<2x128xf32>
      %25 = arith.subf %23, %24 : vector<2x128xf32>
      %26 = math.exp %21 : vector<2x128xf32>
      %27 = arith.subf %25, %26 : vector<2x128xf32>
      %28 = vector.shape_cast %27 : vector<2x128xf32> to vector<1x2x128xf32>
      %cst_18 = arith.constant dense<0.000000e+00> : vector<1xf32>
      %29 = vector.multi_reduction <add>, %28, %cst_18 [1, 2] : vector<1x2x128xf32> to vector<1xf32>
      %30 = vector.shape_cast %29 : vector<1xf32> to vector<1x1x1xf32>
      %31 = vector.extract %30[0, 0, 0] : f32 from vector<1x1x1xf32>
      %32 = vector.broadcast %31 : f32 to vector<1x1x1xf32>
      %c0_19 = arith.constant 0 : index
      %c0_20 = arith.constant 0 : index
      %c0_21 = arith.constant 0 : index
      %33 = vector.load %arg7[%c0_19, %c0_20, %c0_21] : memref<1x1x1xf32, #tpu.memory_space<vmem>>, vector<1x1x1xf32>
      tpu.vector_store %arg7[%c0_19, %c0_20, %c0_21], %32 {strides = array<i32>} : memref<1x1x1xf32, #tpu.memory_space<vmem>>, vector<1x1x1xf32>,
    } else {
    }
    %c0 = arith.constant 0 : index
    %c0_4 = arith.constant 0 : index
    %8 = vector.load %arg2[%c0, %c0_4] : memref<16x128xf32, #tpu.memory_space<vmem>>, vector<16x128xf32>
    %c0_5 = arith.constant 0 : index
    %c0_6 = arith.constant 0 : index
    %9 = vector.load %arg3[%c0_5, %c0_6] : memref<16x128xf32, #tpu.memory_space<vmem>>, vector<16x128xf32>
    %10 = arith.subf %9, %8 : vector<16x128xf32>
    %11 = math.absf %10 : vector<16x128xf32>
    %c0_7 = arith.constant 0 : index
    %c0_8 = arith.constant 0 : index
    %12 = vector.load %arg8[%c0_7, %c0_8] : memref<8x128xf32, #tpu.memory_space<vmem>>, vector<8x128xf32>
    %13 = vector.shape_cast %11 : vector<16x128xf32> to vector<2x8x128xf32>
    %cst = arith.constant dense<0.000000e+00> : vector<8x128xf32>
    %14 = vector.multi_reduction <add>, %13, %cst [0] : vector<2x8x128xf32> to vector<8x128xf32>
    %15 = arith.addf %12, %14 : vector<8x128xf32>
    %c0_9 = arith.constant 0 : index
    %c0_10 = arith.constant 0 : index
    %16 = vector.load %arg8[%c0_9, %c0_10] : memref<8x128xf32, #tpu.memory_space<vmem>>, vector<8x128xf32>
    tpu.vector_store %arg8[%c0_9, %c0_10], %15 {strides = array<i32>} : memref<8x128xf32, #tpu.memory_space<vmem>>, vector<8x128xf32>,
    %c0_i32_11 = arith.constant 0 : i32
    %17 = arith.cmpi eq, %arg1, %c0_i32_11 : i32
    %18 = arith.extui %17 : i1 to i32
    %c0_i32_12 = arith.constant 0 : i32
    %19 = arith.cmpi ne, %18, %c0_i32_12 : i32
    scf.if %19 {
      %c0_13 = arith.constant 0 : index
      %c0_14 = arith.constant 0 : index
      %20 = vector.load %arg8[%c0_13, %c0_14] : memref<8x128xf32, #tpu.memory_space<vmem>>, vector<8x128xf32>
      %21 = vector.shape_cast %20 : vector<8x128xf32> to vector<1x8x128xf32>
      %cst_15 = arith.constant dense<0.000000e+00> : vector<1xf32>
      %22 = vector.multi_reduction <add>, %21, %cst_15 [1, 2] : vector<1x8x128xf32> to vector<1xf32>
      %23 = vector.shape_cast %22 : vector<1xf32> to vector<1x1x1xf32>
      %24 = vector.extract %23[0, 0, 0] : f32 from vector<1x1x1xf32>
      %25 = vector.broadcast %24 : f32 to vector<1x1x1xf32>
      %c0_16 = arith.constant 0 : index
      %c0_17 = arith.constant 0 : index
      %c0_18 = arith.constant 0 : index
      %26 = vector.load %arg6[%c0_16, %c0_17, %c0_18] : memref<1x1x1xf32, #tpu.memory_space<vmem>>, vector<1x1x1xf32>
      tpu.vector_store %arg6[%c0_16, %c0_17, %c0_18], %25 {strides = array<i32>} : memref<1x1x1xf32, #tpu.memory_space<vmem>>, vector<1x1x1xf32>,
    } else {
    }
    return
  }
  func.func @transform_0(%arg0: i32, %arg1: i32) -> (i32, i32) {
    %c1_i32 = arith.constant 1 : i32
    %0 = arith.muli %arg0, %c1_i32 : i32
    %1 = arith.addi %0, %arg1 : i32
    %c0_i32 = arith.constant 0 : i32
    %c0_i32_0 = arith.constant 0 : i32
    return %1, %c0_i32 : i32, i32
  }
  func.func @transform_1(%arg0: i32, %arg1: i32) -> (i32, i32) {
    %c1_i32 = arith.constant 1 : i32
    %0 = arith.muli %arg0, %c1_i32 : i32
    %1 = arith.addi %0, %arg1 : i32
    %c0_i32 = arith.constant 0 : i32
    %c0_i32_0 = arith.constant 0 : i32
    return %1, %c0_i32 : i32, i32
  }
  func.func @transform_2(%arg0: i32, %arg1: i32) -> (i32, i32) {
    %c0_i32 = arith.constant 0 : i32
    %c0_i32_0 = arith.constant 0 : i32
    %c0_i32_1 = arith.constant 0 : i32
    return %c0_i32, %c0_i32_0 : i32, i32
  }
  func.func @transform_3(%arg0: i32, %arg1: i32) -> (i32, i32) {
    %c0_i32 = arith.constant 0 : i32
    %c0_i32_0 = arith.constant 0 : i32
    %c0_i32_1 = arith.constant 0 : i32
    return %c0_i32, %c0_i32_0 : i32, i32
  }
  func.func @transform_4(%arg0: i32, %arg1: i32) -> (i32, i32, i32) {
    %c0_i32 = arith.constant 0 : i32
    %c0_i32_0 = arith.constant 0 : i32
    %c0_i32_1 = arith.constant 0 : i32
    return %arg0, %c0_i32, %c0_i32_0 : i32, i32, i32
  }
  func.func @transform_5(%arg0: i32, %arg1: i32) -> (i32, i32, i32) {
    %c0_i32 = arith.constant 0 : i32
    %c0_i32_0 = arith.constant 0 : i32
    %c0_i32_1 = arith.constant 0 : i32
    return %arg0, %c0_i32, %c0_i32_0 : i32, i32, i32
  }
}

</mosaic_0001>

<llo_original>
// kernel: _forward.1
$region0: #{_forward.1}
  #allocation0 [shape = 'u32[]', space=smem, size = 0x4, offset = 0x4, fixed_abs, tag = 'smem constant byte address 0x4 - core index']
  #allocation1 [shape = 'u32[144,128]{1,0:T(1,128)}', space=vmem, size = 0x12000, scoped, tag = 'internal scratch']
  #allocation2 [shape = 'f32[8,128]{1,0:T(8,128)}', space=vmem, size = 0x1000, scoped, tag = 'scratch operand']
  %s0 = inlined_call_operand.vmem [shape: f32[16,128], index: 0, kind: input, shape index: {}]
  %s1 = inlined_call_operand.vmem [shape: f32[16,128], index: 1, kind: input, shape index: {}]
  %s2 = inlined_call_operand.vmem [shape: f32[2,128], index: 2, kind: input, shape index: {}]
  %s3 = inlined_call_operand.vmem [shape: f32[2,128], index: 3, kind: input, shape index: {}]
  %s4 = inlined_call_operand.hbm [shape: f32[1,1,1], index: 4, kind: output, shape index: {0}]
  %s5 = inlined_call_operand.hbm [shape: f32[1,1,1], index: 5, kind: output, shape index: {1}]
  %6 = xla_tuple %s4, %s5
  %s7 = sld [smem:[#allocation0]]
  $region46: #{_forward.1} parent=0
    _
  %s9 = ssub.s32 1, %s7
  %s10 = scalar_select 0, %s9, %s7
  $region1: #{_forward.1} parent=0
    #allocation3 [shape = 'u8[512]{0}', space=vmem, size = 0x400, scoped, tag = 'output window, operand 0, single buffered']
    #allocation4 [shape = 's32[1]{0}', space=sflag, size = 0x4, scoped, tag = 'scoped memory for _forward.1']
    #allocation5 [shape = 'u8[512]{0}', space=vmem, size = 0x400, scoped, tag = 'output window, operand 1, single buffered']
    #allocation6 [shape = 's32[1]{0}', space=sflag, size = 0x4, scoped, tag = 'scoped memory for _forward.1']
    %11 = vsyncpa [#allocation4], 0
    %12 = vsyncpa [#allocation6], 0
    // Predicated region
    $region2: #{_forward.1} parent=1 // pred_check
      _
    $region3: #{_forward.1} parent=1 // pred_check_branch
      %14 = sbr.rel (0) target = $region5
    $region4: #{_forward.1} parent=1 // pred_region
      %s15 = sadd.s32 0, 0
      %s16 = smul.u32 2, %s15
      %p17 = scmp.lt.s32.totalorder %s16, 1
      %s18 = scalar_select %p17, %s16, 1
      %s19 = smul.addr %s18, 8
      %s20 = scalar_lea.vmem %s0, %s19
      %s21 = sadd.s32 0, 0
      %s22 = smul.u32 2, %s21
    $region5: #{_forward.1} parent=1 // pred_fallthru
      _
    // Predicated region
    $region6: #{_forward.1} parent=1 // pred_check
      _
    $region7: #{_forward.1} parent=1 // pred_check_branch
      %24 = sbr.rel (0) target = $region9
    $region8: #{_forward.1} parent=1 // pred_region
      %s25 = sadd.s32 0, 0
      %s26 = smul.u32 2, %s25
      %p27 = scmp.lt.s32.totalorder %s26, 1
      %s28 = scalar_select %p27, %s26, 1
      %s29 = smul.addr %s28, 8
      %s30 = scalar_lea.vmem %s1, %s29
      %s31 = sadd.s32 0, 0
      %s32 = smul.u32 2, %s31
    $region9: #{_forward.1} parent=1 // pred_fallthru
      _
    // Predicated region
    $region10: #{_forward.1} parent=1 // pred_check
      _
    $region11: #{_forward.1} parent=1 // pred_check_branch
      %34 = sbr.rel (0) target = $region13
    $region12: #{_forward.1} parent=1 // pred_region
      _
    $region13: #{_forward.1} parent=1 // pred_fallthru
      _
    // Predicated region
    $region14: #{_forward.1} parent=1 // pred_check
      _
    $region15: #{_forward.1} parent=1 // pred_check_branch
      %36 = sbr.rel (0) target = $region17
    $region16: #{_forward.1} parent=1 // pred_region
      _
    $region17: #{_forward.1} parent=1 // pred_fallthru
      _
    %s37 = sadd.s32 0, 0
    %s38 = smul.u32 2, %s37
    %p39 = scmp.lt.s32.totalorder %s38, 1
    %s40 = scalar_select %p39, %s38, 1
    %s41 = smul.addr %s40, 8
    %s42 = scalar_lea.vmem %s0, %s41
    %s43 = sadd.s32 0, 0
    %s44 = smul.u32 2, %s43
    %p45 = scmp.lt.s32.totalorder %s44, 1
    %s46 = scalar_select %p45, %s44, 1
    %s47 = smul.addr %s46, 8
    %s48 = scalar_lea.vmem %s1, %s47
    %s49 = sadd.s32 0, 0
    %s50 = smul.u32 2, %s49
    %p51 = scmp.lt.s32.totalorder %s50, 1
    %s52 = scalar_select %p51, %s50, 1
    %s53 = smul.addr %s52, 8
    %s54 = scalar_lea.vmem %s0, %s53
    %s55 = sadd.s32 0, 0
    %s56 = smul.u32 2, %s55
    %s57 = sadd.s32 0, 0
    %s58 = smul.u32 2, %s57
    %p59 = scmp.lt.s32.totalorder %s58, 1
    %s60 = scalar_select %p59, %s58, 1
    %s61 = smul.addr %s60, 8
    %s62 = scalar_lea.vmem %s1, %s61
    %s63 = sadd.s32 0, 0
    %s64 = smul.u32 2, %s63
    %p65 = scmp.eq.s32.totalorder 0, 0
    // Predicated region
    $region18: #{_forward.1} parent=1 // pred_check
      %p66 = pneg %p65
    $region19: #{_forward.1} parent=1 // pred_check_branch
      %68 = sbr.rel (%p66) target = $region21
    $region20: #{_forward.1} parent=1 // pred_region
      %69 = vst [vmem:[#allocation2] sm:$0xff] 0.0
      %vm70 = vcmask 0
      %71 = vst.msk [vmem:[#allocation5] sm:$0x1] %vm70, 0.0
    $region21: #{_forward.1} parent=1 // pred_fallthru
      _
    %p72 = scmp.eq.s32.totalorder 0, 0
    %p73 = pnand %p72, %p65
    %p74 = pneg %p73
    // Predicated region
    $region22: #{_forward.1} parent=1 // pred_check
      _
    $region23: #{_forward.1} parent=1 // pred_check_branch
      %76 = sbr.rel (%p73) target = $region25
    $region24: #{_forward.1} parent=1 // pred_region
      %v77 = vld [vmem:[%s2] sm:$0x3]
      %v78 = vld [vmem:[%s3] sm:$0x3]
      %v79 = vadd.f32 %v78, 1.0
      %v80 = vmul.f32 %v77, %v77
      %v81 = vsub.f32 %v79, %v80
      %v82 = vmul.f32 %v78, 1.442695
      %v83 = vpow.pop %v82
      %v84 = vsub.f32 %v81, %v83
      %vm85 = vcmask 1041408
      %v86 = vsel %vm85, %v84, 0.0
      %87 = vadd.xlane.f32.xlu0 %v86
      %v88 = vpop.xlane.xlu0 %87
      %v89 = vrot.slane %v88, 4
      %v90 = vadd.f32 %v88, %v89
      %v91 = vrot.slane %v90, 2
      %v92 = vadd.f32 %v90, %v91
      %v93 = vrot.slane %v92, 1
      %v94 = vadd.f32 %v92, %v93
      %s95 = vtos %v94
      %v96 = vstv %s95
      %vm97 = vcmask 0
      %98 = vst.msk [vmem:[#allocation5] sm:$0x1] %vm97, %v96
    $region25: #{_forward.1} parent=1 // pred_fallthru
      _
    %v99 = vld [vmem:[%s54] sm:$0xff]
    %v100 = vld [vmem:[%s54 + $0x8] sm:$0xff]
    %v101 = vld [vmem:[%s62] sm:$0xff]
    %v102 = vld [vmem:[%s62 + $0x8] sm:$0xff]
    %v103 = vsub.f32 %v101, %v99
    %v104 = vsub.f32 %v102, %v100
    %v105 = vand.u32 2147483647, %v103
    %v106 = vand.u32 2147483647, %v104
    %v107 = vld [vmem:[#allocation2] sm:$0xff]
    %v108 = vadd.f32 %v105, %v106
    %v109 = vadd.f32 %v107, %v108
    %110 = vst [vmem:[#allocation2] sm:$0xff] %v109
    // Predicated region
    $region26: #{_forward.1} parent=1 // pred_check
      %p111 = pneg %p65
    $region27: #{_forward.1} parent=1 // pred_check_branch
      %113 = sbr.rel (%p111) target = $region29
    $region28: #{_forward.1} parent=1 // pred_region
      %v114 = vld [vmem:[#allocation2] sm:$0xff]
      %115 = vadd.xlane.f32.xlu0 %v114
      %v116 = vpop.xlane.xlu0 %115
      %v117 = vrot.slane %v116, 4
      %v118 = vadd.f32 %v116, %v117
      %v119 = vrot.slane %v118, 2
      %v120 = vadd.f32 %v118, %v119
      %v121 = vrot.slane %v120, 1
      %v122 = vadd.f32 %v120, %v121
      %s123 = vtos %v122
      %v124 = vstv %s123
      %vm125 = vcmask 0
      %126 = vst.msk [vmem:[#allocation3] sm:$0x1] %vm125, %v124
    $region29: #{_forward.1} parent=1 // pred_fallthru
      _
    // Predicated region
    $region30: #{_forward.1} parent=1 // pred_check
      _
    $region31: #{_forward.1} parent=1 // pred_check_branch
      %128 = sbr.rel (0) target = $region33
    $region32: #{_forward.1} parent=1 // pred_region
      %s130 = ssub.s32 16, 16
      %131 = vsyncadd [#allocation4], %s130
      %s133 = sshll.u32 [#allocation3], 4
      %s134 = int_to_ptr.vmem [resolvable:$true] %s133
      %136 = dma.vmem_to_hbm [thread:$0]  %s134, 16, %s4, [#allocation4]
    $region33: #{_forward.1} parent=1 // pred_fallthru
      _
    // Predicated region
    $region34: #{_forward.1} parent=1 // pred_check
      _
    $region35: #{_forward.1} parent=1 // pred_check_branch
      %138 = sbr.rel (0) target = $region37
    $region36: #{_forward.1} parent=1 // pred_region
      %s140 = ssub.s32 16, 16
      %141 = vsyncadd [#allocation6], %s140
      %s143 = sshll.u32 [#allocation5], 4
      %s144 = int_to_ptr.vmem [resolvable:$true] %s143
      %146 = dma.vmem_to_hbm [thread:$0]  %s144, 16, %s5, [#allocation6]
    $region37: #{_forward.1} parent=1 // pred_fallthru
      _
    // Predicated region
    $region38: #{_forward.1} parent=1 // pred_check
      _
    $region39: #{_forward.1} parent=1 // pred_check_branch
      %148 = sbr.rel (0) target = $region41
    $region40: #{_forward.1} parent=1 // pred_region
      %149 = dma.done [#allocation4], 16
    $region41: #{_forward.1} parent=1 // pred_fallthru
      _
    // Predicated region
    $region42: #{_forward.1} parent=1 // pred_check
      _
    $region43: #{_forward.1} parent=1 // pred_check_branch
      %151 = sbr.rel (0) target = $region45
    $region44: #{_forward.1} parent=1 // pred_region
      %152 = dma.done [#allocation6], 16
    $region45: #{_forward.1} parent=1 // pred_fallthru
      _
    %153 = vsyncpa [#allocation4], 1
    %154 = vsyncpa [#allocation6], 1

</llo_original>
